<compile_context>
chip_gen: v7x
topology: tpu7x:2x2x1
jax: 0.10.0
libtpu: 0.0.40
codegen_flags: <defaults>
</compile_context>

<pallas_src>
from functools import partial

import jax
import jax.numpy as jnp
from jax.experimental import pallas as pl
from jax.experimental.pallas import tpu as pltpu

HIDDEN = 16    # nn.LSTM(input_dim, 16)
MLP_H = 8      # nn.Linear(16, 8)
OUT_PAD = 128  # lane-dense output width (sliced back to out_dim in the wrapper)


def _lstm_classifier_kernel(x_ref, wih_ref, whh_ref, b_ref,
                            w1_ref, b1_ref, w2_ref, b2_ref, out_ref,
                            *, n_steps, batch, hidden):
    H = hidden
    B = batch
    T = n_steps
    f32 = jnp.float32
    bf16 = jnp.bfloat16

    # Hoisted, non-recurrent input projection: one wide bf16 MXU matmul over all
    # B*T rows with f32 accumulation.  The bias already carries the tanh->sigmoid
    # 2x fold on the g-gate columns (done once at param-prep time).
    x_bf = x_ref[...].astype(bf16)                                     # (B*T, D)
    xg = jnp.dot(x_bf, wih_ref[...],
                 preferred_element_type=f32) + b_ref[...]              # (B*T, 4H) f32

    # Batch-major rows -> per-step (B, 4H) slabs via static sublane slices.
    # Independent of the recurrent state, so this sits off the serial chain.
    xg_steps = [
        jnp.concatenate(
            [xg[b * T + t:b * T + t + 1, :] for b in range(B)], axis=0)
        for t in range(T)
    ]

    whh = whh_ref[...]                                                 # (H, 4H) bf16, resident
    h = jnp.zeros((B, H), f32)
    c = jnp.zeros((B, H), f32)

    # Statically unrolled recurrence: only h @ W_hh^T (bf16 MXU, f32 acc) and the
    # gate nonlinearities stay on the serial critical path.
    for t in range(T):
        gates = xg_steps[t] + jnp.dot(h.astype(bf16), whh,
                                      preferred_element_type=f32)      # (B, 4H) f32
        sg = jax.nn.sigmoid(gates)                 # single full-width EUP pass
        # tanh(g) from the pre-scaled g columns: tanh(x) = 2*sigmoid(2x) - 1 (VPU only).
        g_act = 2.0 * sg[:, 2 * H:3 * H] - 1.0
        c = sg[:, H:2 * H] * c + sg[:, :H] * g_act
        h = sg[:, 3 * H:] * jnp.tanh(c)            # second (and last) EUP push / step
        # TODO(synk): if the bundle dump shows MXU pop latency or XLU rotates from
        # the 16/32/48-lane gate slices dominating the per-step chain, replace this
        # dot with a VPU/XLU outer-product accumulation and/or lane-align the gate
        # operands (perf-review items gated on bundle inspection).

    # Fused MLP head on the last hidden state (runs once; kept f32 — off the
    # serial path, so bf16 buys nothing here).
    y1 = jnp.maximum(
        jnp.dot(h, w1_ref[...], preferred_element_type=f32) + b1_ref[...], 0.0)
    y2 = jnp.dot(y1, w2_ref[...], preferred_element_type=f32) + b2_ref[...]
    out_ref[...] = y2.astype(out_ref.dtype)        # (B, 128) lane-dense store


def prepare_params(params):
    """One-time weight prep, hoisted out of the per-call path.

    - transpose PyTorch (out, in) weights to row-major matmul layout
    - fold b_ih + b_hh into one bias
    - pre-scale the g-gate columns by 2 so tanh(g) == 2*sigmoid(2g) - 1 in-kernel
    - pre-cast the projection/recurrence weights to bf16 (MXU operands only)
    - lane-pad the head output weights/bias to 128 for an unmasked store
    """
    H = HIDDEN
    out_dim = params["w2"].shape[0]
    gscale = jnp.ones((1, 4 * H), jnp.float32).at[:, 2 * H:3 * H].set(2.0)
    wih_t = params["w_ih"].T * gscale                                   # (D, 4H)
    whh_t = params["w_hh"].T * gscale                                   # (H, 4H)
    b = (params["b_ih"] + params["b_hh"]).reshape(1, 4 * H) * gscale
    w2_pad = jnp.zeros((MLP_H, OUT_PAD), jnp.float32).at[:, :out_dim].set(params["w2"].T)
    b2_pad = jnp.zeros((1, OUT_PAD), jnp.float32).at[:, :out_dim].set(params["b2"])
    return {
        "wih": wih_t.astype(jnp.bfloat16),
        "whh": whh_t.astype(jnp.bfloat16),
        "b": b.astype(jnp.float32),
        "w1": params["w1"].T.astype(jnp.float32),                       # (H, 8)
        "b1": params["b1"].reshape(1, MLP_H).astype(jnp.float32),
        "w2": w2_pad,
        "b2": b2_pad,
    }


@partial(jax.jit, static_argnames=("out_dim",))
def lstm_classifier(x, prep, *, out_dim):
    B, T, D = x.shape
    # (B, T, D) -> (B*T, D) is a free, metadata-only reshape; all real data
    # rearrangement happens inside the kernel, not as separate HBM XLA ops.
    x2 = x.reshape(B * T, D).astype(jnp.float32)

    # Everything is a few KiB: whole-array VMEM residency, single invocation,
    # no grid / pipeline bookkeeping.  (For large B: add a "parallel" batch grid
    # axis so v7x's second TensorCore gets work and xg stays within 64 MiB VMEM.)
    vmem = pl.BlockSpec(memory_space=pltpu.MemorySpace.VMEM)
    kernel = partial(_lstm_classifier_kernel, n_steps=T, batch=B, hidden=HIDDEN)

    out_padded = pl.pallas_call(
        kernel,
        out_shape=jax.ShapeDtypeStruct((B, OUT_PAD), jnp.float32),
        in_specs=[vmem] * 8,
        out_specs=vmem,
    )(x2, prep["wih"], prep["whh"], prep["b"],
      prep["w1"], prep["b1"], prep["w2"], prep["b2"])

    # torch.squeeze(X[:, -1, :]) is a no-op for B > 1 -> result is (B, out_dim).
    # TODO(synk): for B == 1 PyTorch's squeeze would return shape (out_dim,).
    return out_padded[:, :out_dim]


def _lstm_classifier_ref(x, params):
    """Pure-JAX f32 reference of the PyTorch forward (for correctness check)."""
    B, T, D = x.shape
    H = HIDDEN
    b = params["b_ih"] + params["b_hh"]
    h = jnp.zeros((B, H), jnp.float32)
    c = jnp.zeros((B, H), jnp.float32)
    for t in range(T):
        g = x[:, t, :] @ params["w_ih"].T + h @ params["w_hh"].T + b
        i_g = jax.nn.sigmoid(g[:, :H])
        f_g = jax.nn.sigmoid(g[:, H:2 * H])
        g_g = jnp.tanh(g[:, 2 * H:3 * H])
        o_g = jax.nn.sigmoid(g[:, 3 * H:])
        c = f_g * c + i_g * g_g
        h = o_g * jnp.tanh(c)
    y1 = jnp.maximum(h @ params["w1"].T + params["b1"], 0.0)
    return y1 @ params["w2"].T + params["b2"]


def init_params(key, input_dim, output_dim):
    """Deterministic synthetic parameters matching PyTorch shapes."""
    ks = jax.random.split(key, 8)
    H = HIDDEN
    scale = 0.1
    return {
        "w_ih": scale * jax.random.normal(ks[0], (4 * H, input_dim), jnp.float32),
        "w_hh": scale * jax.random.normal(ks[1], (4 * H, H), jnp.float32),
        "b_ih": scale * jax.random.normal(ks[2], (4 * H,), jnp.float32),
        "b_hh": scale * jax.random.normal(ks[3], (4 * H,), jnp.float32),
        "w1": scale * jax.random.normal(ks[4], (MLP_H, H), jnp.float32),
        "b1": scale * jax.random.normal(ks[5], (MLP_H,), jnp.float32),
        "w2": scale * jax.random.normal(ks[6], (output_dim, MLP_H), jnp.float32),
        "b2": scale * jax.random.normal(ks[7], (output_dim,), jnp.float32),
    }


if __name__ == "__main__":
    B, T, D, OUT = 2, 8, 8, 4
    key = jax.random.PRNGKey(0)
    k_x, k_p = jax.random.split(key)
    x = jax.random.normal(k_x, (B, T, D), jnp.float32)
    params = init_params(k_p, D, OUT)

    prep = prepare_params(params)            # one-time weight prep (not per-call)
    out = lstm_classifier(x, prep, out_dim=OUT)
    jax.block_until_ready(out)
    assert out.shape == (B, OUT)

    ref = _lstm_classifier_ref(x, params)
    max_err = float(jnp.max(jnp.abs(out - ref)))
    assert max_err < 1e-2, f"mismatch vs reference: {max_err}"

    print("KERNEL_OK")
</pallas_src>

<mosaic_0001>
module attributes {stable_mosaic.version = 11 : i64} {
  func.func @_lstm_classifier_kernel(%arg0: memref<16x8xf32, #tpu.memory_space<vmem>>, %arg1: memref<8x64xbf16, #tpu.memory_space<vmem>>, %arg2: memref<16x64xbf16, #tpu.memory_space<vmem>>, %arg3: memref<1x64xf32, #tpu.memory_space<vmem>>, %arg4: memref<16x8xf32, #tpu.memory_space<vmem>>, %arg5: memref<1x8xf32, #tpu.memory_space<vmem>>, %arg6: memref<8x128xf32, #tpu.memory_space<vmem>>, %arg7: memref<1x128xf32, #tpu.memory_space<vmem>>, %arg8: memref<2x128xf32, #tpu.memory_space<vmem>>) attributes {dimension_semantics = [], scalar_prefetch = 0 : i64, scratch_operands = 0 : i64, tpu.core_type = #tpu.core_type<tc>} {
    %c0 = arith.constant 0 : index
    %c0_0 = arith.constant 0 : index
    %0 = vector.load %arg0[%c0, %c0_0] : memref<16x8xf32, #tpu.memory_space<vmem>>, vector<16x8xf32>
    %1 = arith.truncf %0 : vector<16x8xf32> to vector<16x8xbf16>
    %c0_1 = arith.constant 0 : index
    %c0_2 = arith.constant 0 : index
    %2 = vector.load %arg1[%c0_1, %c0_2] : memref<8x64xbf16, #tpu.memory_space<vmem>>, vector<8x64xbf16>
    %cst = arith.constant dense<0.000000e+00> : vector<16x64xf32>
    %3 = tpu.matmul %1, %2, %cst {dimension_numbers = #tpu.dot_dimension_numbers<[1], [0], [0], [1], [0, 0, 1, 1], [], []>} : vector<16x8xbf16>, vector<8x64xbf16>, vector<16x64xf32> -> vector<16x64xf32>
    %c0_3 = arith.constant 0 : index
    %c0_4 = arith.constant 0 : index
    %4 = vector.load %arg3[%c0_3, %c0_4] : memref<1x64xf32, #tpu.memory_space<vmem>>, vector<1x64xf32>
    %5 = vector.broadcast %4 : vector<1x64xf32> to vector<16x64xf32>
    %6 = arith.addf %3, %5 : vector<16x64xf32>
    %7 = vector.extract_strided_slice %6 {offsets = [0, 0], sizes = [1, 64], strides = [1, 1]} : vector<16x64xf32> to vector<1x64xf32>
    %8 = vector.extract_strided_slice %6 {offsets = [8, 0], sizes = [1, 64], strides = [1, 1]} : vector<16x64xf32> to vector<1x64xf32>
    %9 = tpu.concatenate %7, %8 in 0 : vector<1x64xf32>, vector<1x64xf32> -> vector<2x64xf32>
    %10 = vector.extract_strided_slice %6 {offsets = [1, 0], sizes = [1, 64], strides = [1, 1]} : vector<16x64xf32> to vector<1x64xf32>
    %11 = vector.extract_strided_slice %6 {offsets = [9, 0], sizes = [1, 64], strides = [1, 1]} : vector<16x64xf32> to vector<1x64xf32>
    %12 = tpu.concatenate %10, %11 in 0 : vector<1x64xf32>, vector<1x64xf32> -> vector<2x64xf32>
    %13 = vector.extract_strided_slice %6 {offsets = [2, 0], sizes = [1, 64], strides = [1, 1]} : vector<16x64xf32> to vector<1x64xf32>
    %14 = vector.extract_strided_slice %6 {offsets = [10, 0], sizes = [1, 64], strides = [1, 1]} : vector<16x64xf32> to vector<1x64xf32>
    %15 = tpu.concatenate %13, %14 in 0 : vector<1x64xf32>, vector<1x64xf32> -> vector<2x64xf32>
    %16 = vector.extract_strided_slice %6 {offsets = [3, 0], sizes = [1, 64], strides = [1, 1]} : vector<16x64xf32> to vector<1x64xf32>
    %17 = vector.extract_strided_slice %6 {offsets = [11, 0], sizes = [1, 64], strides = [1, 1]} : vector<16x64xf32> to vector<1x64xf32>
    %18 = tpu.concatenate %16, %17 in 0 : vector<1x64xf32>, vector<1x64xf32> -> vector<2x64xf32>
    %19 = vector.extract_strided_slice %6 {offsets = [4, 0], sizes = [1, 64], strides = [1, 1]} : vector<16x64xf32> to vector<1x64xf32>
    %20 = vector.extract_strided_slice %6 {offsets = [12, 0], sizes = [1, 64], strides = [1, 1]} : vector<16x64xf32> to vector<1x64xf32>
    %21 = tpu.concatenate %19, %20 in 0 : vector<1x64xf32>, vector<1x64xf32> -> vector<2x64xf32>
    %22 = vector.extract_strided_slice %6 {offsets = [5, 0], sizes = [1, 64], strides = [1, 1]} : vector<16x64xf32> to vector<1x64xf32>
    %23 = vector.extract_strided_slice %6 {offsets = [13, 0], sizes = [1, 64], strides = [1, 1]} : vector<16x64xf32> to vector<1x64xf32>
    %24 = tpu.concatenate %22, %23 in 0 : vector<1x64xf32>, vector<1x64xf32> -> vector<2x64xf32>
    %25 = vector.extract_strided_slice %6 {offsets = [6, 0], sizes = [1, 64], strides = [1, 1]} : vector<16x64xf32> to vector<1x64xf32>
    %26 = vector.extract_strided_slice %6 {offsets = [14, 0], sizes = [1, 64], strides = [1, 1]} : vector<16x64xf32> to vector<1x64xf32>
    %27 = tpu.concatenate %25, %26 in 0 : vector<1x64xf32>, vector<1x64xf32> -> vector<2x64xf32>
    %28 = vector.extract_strided_slice %6 {offsets = [7, 0], sizes = [1, 64], strides = [1, 1]} : vector<16x64xf32> to vector<1x64xf32>
    %29 = vector.extract_strided_slice %6 {offsets = [15, 0], sizes = [1, 64], strides = [1, 1]} : vector<16x64xf32> to vector<1x64xf32>
    %30 = tpu.concatenate %28, %29 in 0 : vector<1x64xf32>, vector<1x64xf32> -> vector<2x64xf32>
    %c0_5 = arith.constant 0 : index
    %c0_6 = arith.constant 0 : index
    %31 = vector.load %arg2[%c0_5, %c0_6] : memref<16x64xbf16, #tpu.memory_space<vmem>>, vector<16x64xbf16>
    %cst_7 = arith.constant 0.000000e+00 : f32
    %32 = vector.broadcast %cst_7 : f32 to vector<2x16xf32>
    %cst_8 = arith.constant 0.000000e+00 : f32
    %33 = vector.broadcast %cst_8 : f32 to vector<2x16xf32>
    %34 = arith.truncf %32 : vector<2x16xf32> to vector<2x16xbf16>
    %cst_9 = arith.constant dense<0.000000e+00> : vector<2x64xf32>
    %35 = tpu.matmul %34, %31, %cst_9 {dimension_numbers = #tpu.dot_dimension_numbers<[1], [0], [0], [1], [0, 0, 1, 1], [], []>} : vector<2x16xbf16>, vector<16x64xbf16>, vector<2x64xf32> -> vector<2x64xf32>
    %36 = arith.addf %9, %35 : vector<2x64xf32>
    %37 = arith.negf %36 : vector<2x64xf32>
    %38 = math.exp %37 : vector<2x64xf32>
    %cst_10 = arith.constant 1.000000e+00 : f32
    %39 = vector.broadcast %cst_10 : f32 to vector<2x64xf32>
    %40 = arith.addf %39, %38 : vector<2x64xf32>
    %41 = arith.divf %39, %40 : vector<2x64xf32>
    %42 = vector.extract_strided_slice %41 {offsets = [0, 32], sizes = [2, 16], strides = [1, 1]} : vector<2x64xf32> to vector<2x16xf32>
    %cst_11 = arith.constant 2.000000e+00 : f32
    %43 = vector.broadcast %cst_11 : f32 to vector<2x16xf32>
    %44 = arith.mulf %43, %42 : vector<2x16xf32>
    %cst_12 = arith.constant 1.000000e+00 : f32
    %45 = vector.broadcast %cst_12 : f32 to vector<2x16xf32>
    %46 = arith.subf %44, %45 : vector<2x16xf32>
    %47 = vector.extract_strided_slice %41 {offsets = [0, 16], sizes = [2, 16], strides = [1, 1]} : vector<2x64xf32> to vector<2x16xf32>
    %48 = arith.mulf %47, %33 : vector<2x16xf32>
    %49 = vector.extract_strided_slice %41 {offsets = [0, 0], sizes = [2, 16], strides = [1, 1]} : vector<2x64xf32> to vector<2x16xf32>
    %50 = arith.mulf %49, %46 : vector<2x16xf32>
    %51 = arith.addf %48, %50 : vector<2x16xf32>
    %52 = vector.extract_strided_slice %41 {offsets = [0, 48], sizes = [2, 16], strides = [1, 1]} : vector<2x64xf32> to vector<2x16xf32>
    %53 = math.tanh %51 : vector<2x16xf32>
    %54 = arith.mulf %52, %53 : vector<2x16xf32>
    %55 = arith.truncf %54 : vector<2x16xf32> to vector<2x16xbf16>
    %cst_13 = arith.constant dense<0.000000e+00> : vector<2x64xf32>
    %56 = tpu.matmul %55, %31, %cst_13 {dimension_numbers = #tpu.dot_dimension_numbers<[1], [0], [0], [1], [0, 0, 1, 1], [], []>} : vector<2x16xbf16>, vector<16x64xbf16>, vector<2x64xf32> -> vector<2x64xf32>
    %57 = arith.addf %12, %56 : vector<2x64xf32>
    %58 = arith.negf %57 : vector<2x64xf32>
    %59 = math.exp %58 : vector<2x64xf32>
    %cst_14 = arith.constant 1.000000e+00 : f32
    %60 = vector.broadcast %cst_14 : f32 to vector<2x64xf32>
    %61 = arith.addf %60, %59 : vector<2x64xf32>
    %62 = arith.divf %60, %61 : vector<2x64xf32>
    %63 = vector.extract_strided_slice %62 {offsets = [0, 32], sizes = [2, 16], strides = [1, 1]} : vector<2x64xf32> to vector<2x16xf32>
    %cst_15 = arith.constant 2.000000e+00 : f32
    %64 = vector.broadcast %cst_15 : f32 to vector<2x16xf32>
    %65 = arith.mulf %64, %63 : vector<2x16xf32>
    %cst_16 = arith.constant 1.000000e+00 : f32
    %66 = vector.broadcast %cst_16 : f32 to vector<2x16xf32>
    %67 = arith.subf %65, %66 : vector<2x16xf32>
    %68 = vector.extract_strided_slice %62 {offsets = [0, 16], sizes = [2, 16], strides = [1, 1]} : vector<2x64xf32> to vector<2x16xf32>
    %69 = arith.mulf %68, %51 : vector<2x16xf32>
    %70 = vector.extract_strided_slice %62 {offsets = [0, 0], sizes = [2, 16], strides = [1, 1]} : vector<2x64xf32> to vector<2x16xf32>
    %71 = arith.mulf %70, %67 : vector<2x16xf32>
    %72 = arith.addf %69, %71 : vector<2x16xf32>
    %73 = vector.extract_strided_slice %62 {offsets = [0, 48], sizes = [2, 16], strides = [1, 1]} : vector<2x64xf32> to vector<2x16xf32>
    %74 = math.tanh %72 : vector<2x16xf32>
    %75 = arith.mulf %73, %74 : vector<2x16xf32>
    %76 = arith.truncf %75 : vector<2x16xf32> to vector<2x16xbf16>
    %cst_17 = arith.constant dense<0.000000e+00> : vector<2x64xf32>
    %77 = tpu.matmul %76, %31, %cst_17 {dimension_numbers = #tpu.dot_dimension_numbers<[1], [0], [0], [1], [0, 0, 1, 1], [], []>} : vector<2x16xbf16>, vector<16x64xbf16>, vector<2x64xf32> -> vector<2x64xf32>
    %78 = arith.addf %15, %77 : vector<2x64xf32>
    %79 = arith.negf %78 : vector<2x64xf32>
    %80 = math.exp %79 : vector<2x64xf32>
    %cst_18 = arith.constant 1.000000e+00 : f32
    %81 = vector.broadcast %cst_18 : f32 to vector<2x64xf32>
    %82 = arith.addf %81, %80 : vector<2x64xf32>
    %83 = arith.divf %81, %82 : vector<2x64xf32>
    %84 = vector.extract_strided_slice %83 {offsets = [0, 32], sizes = [2, 16], strides = [1, 1]} : vector<2x64xf32> to vector<2x16xf32>
    %cst_19 = arith.constant 2.000000e+00 : f32
    %85 = vector.broadcast %cst_19 : f32 to vector<2x16xf32>
    %86 = arith.mulf %85, %84 : vector<2x16xf32>
    %cst_20 = arith.constant 1.000000e+00 : f32
    %87 = vector.broadcast %cst_20 : f32 to vector<2x16xf32>
    %88 = arith.subf %86, %87 : vector<2x16xf32>
    %89 = vector.extract_strided_slice %83 {offsets = [0, 16], sizes = [2, 16], strides = [1, 1]} : vector<2x64xf32> to vector<2x16xf32>
    %90 = arith.mulf %89, %72 : vector<2x16xf32>
    %91 = vector.extract_strided_slice %83 {offsets = [0, 0], sizes = [2, 16], strides = [1, 1]} : vector<2x64xf32> to vector<2x16xf32>
    %92 = arith.mulf %91, %88 : vector<2x16xf32>
    %93 = arith.addf %90, %92 : vector<2x16xf32>
    %94 = vector.extract_strided_slice %83 {offsets = [0, 48], sizes = [2, 16], strides = [1, 1]} : vector<2x64xf32> to vector<2x16xf32>
    %95 = math.tanh %93 : vector<2x16xf32>
    %96 = arith.mulf %94, %95 : vector<2x16xf32>
    %97 = arith.truncf %96 : vector<2x16xf32> to vector<2x16xbf16>
    %cst_21 = arith.constant dense<0.000000e+00> : vector<2x64xf32>
    %98 = tpu.matmul %97, %31, %cst_21 {dimension_numbers = #tpu.dot_dimension_numbers<[1], [0], [0], [1], [0, 0, 1, 1], [], []>} : vector<2x16xbf16>, vector<16x64xbf16>, vector<2x64xf32> -> vector<2x64xf32>
    %99 = arith.addf %18, %98 : vector<2x64xf32>
    %100 = arith.negf %99 : vector<2x64xf32>
    %101 = math.exp %100 : vector<2x64xf32>
    %cst_22 = arith.constant 1.000000e+00 : f32
    %102 = vector.broadcast %cst_22 : f32 to vector<2x64xf32>
    %103 = arith.addf %102, %101 : vector<2x64xf32>
    %104 = arith.divf %102, %103 : vector<2x64xf32>
    %105 = vector.extract_strided_slice %104 {offsets = [0, 32], sizes = [2, 16], strides = [1, 1]} : vector<2x64xf32> to vector<2x16xf32>
    %cst_23 = arith.constant 2.000000e+00 : f32
    %106 = vector.broadcast %cst_23 : f32 to vector<2x16xf32>
    %107 = arith.mulf %106, %105 : vector<2x16xf32>
    %cst_24 = arith.constant 1.000000e+00 : f32
    %108 = vector.broadcast %cst_24 : f32 to vector<2x16xf32>
    %109 = arith.subf %107, %108 : vector<2x16xf32>
    %110 = vector.extract_strided_slice %104 {offsets = [0, 16], sizes = [2, 16], strides = [1, 1]} : vector<2x64xf32> to vector<2x16xf32>
    %111 = arith.mulf %110, %93 : vector<2x16xf32>
    %112 = vector.extract_strided_slice %104 {offsets = [0, 0], sizes = [2, 16], strides = [1, 1]} : vector<2x64xf32> to vector<2x16xf32>
    %113 = arith.mulf %112, %109 : vector<2x16xf32>
    %114 = arith.addf %111, %113 : vector<2x16xf32>
    %115 = vector.extract_strided_slice %104 {offsets = [0, 48], sizes = [2, 16], strides = [1, 1]} : vector<2x64xf32> to vector<2x16xf32>
    %116 = math.tanh %114 : vector<2x16xf32>
    %117 = arith.mulf %115, %116 : vector<2x16xf32>
    %118 = arith.truncf %117 : vector<2x16xf32> to vector<2x16xbf16>
    %cst_25 = arith.constant dense<0.000000e+00> : vector<2x64xf32>
    %119 = tpu.matmul %118, %31, %cst_25 {dimension_numbers = #tpu.dot_dimension_numbers<[1], [0], [0], [1], [0, 0, 1, 1], [], []>} : vector<2x16xbf16>, vector<16x64xbf16>, vector<2x64xf32> -> vector<2x64xf32>
    %120 = arith.addf %21, %119 : vector<2x64xf32>
    %121 = arith.negf %120 : vector<2x64xf32>
    %122 = math.exp %121 : vector<2x64xf32>
    %cst_26 = arith.constant 1.000000e+00 : f32
    %123 = vector.broadcast %cst_26 : f32 to vector<2x64xf32>
    %124 = arith.addf %123, %122 : vector<2x64xf32>
    %125 = arith.divf %123, %124 : vector<2x64xf32>
    %126 = vector.extract_strided_slice %125 {offsets = [0, 32], sizes = [2, 16], strides = [1, 1]} : vector<2x64xf32> to vector<2x16xf32>
    %cst_27 = arith.constant 2.000000e+00 : f32
    %127 = vector.broadcast %cst_27 : f32 to vector<2x16xf32>
    %128 = arith.mulf %127, %126 : vector<2x16xf32>
    %cst_28 = arith.constant 1.000000e+00 : f32
    %129 = vector.broadcast %cst_28 : f32 to vector<2x16xf32>
    %130 = arith.subf %128, %129 : vector<2x16xf32>
    %131 = vector.extract_strided_slice %125 {offsets = [0, 16], sizes = [2, 16], strides = [1, 1]} : vector<2x64xf32> to vector<2x16xf32>
    %132 = arith.mulf %131, %114 : vector<2x16xf32>
    %133 = vector.extract_strided_slice %125 {offsets = [0, 0], sizes = [2, 16], strides = [1, 1]} : vector<2x64xf32> to vector<2x16xf32>
    %134 = arith.mulf %133, %130 : vector<2x16xf32>
    %135 = arith.addf %132, %134 : vector<2x16xf32>
    %136 = vector.extract_strided_slice %125 {offsets = [0, 48], sizes = [2, 16], strides = [1, 1]} : vector<2x64xf32> to vector<2x16xf32>
    %137 = math.tanh %135 : vector<2x16xf32>
    %138 = arith.mulf %136, %137 : vector<2x16xf32>
    %139 = arith.truncf %138 : vector<2x16xf32> to vector<2x16xbf16>
    %cst_29 = arith.constant dense<0.000000e+00> : vector<2x64xf32>
    %140 = tpu.matmul %139, %31, %cst_29 {dimension_numbers = #tpu.dot_dimension_numbers<[1], [0], [0], [1], [0, 0, 1, 1], [], []>} : vector<2x16xbf16>, vector<16x64xbf16>, vector<2x64xf32> -> vector<2x64xf32>
    %141 = arith.addf %24, %140 : vector<2x64xf32>
    %142 = arith.negf %141 : vector<2x64xf32>
    %143 = math.exp %142 : vector<2x64xf32>
    %cst_30 = arith.constant 1.000000e+00 : f32
    %144 = vector.broadcast %cst_30 : f32 to vector<2x64xf32>
    %145 = arith.addf %144, %143 : vector<2x64xf32>
    %146 = arith.divf %144, %145 : vector<2x64xf32>
    %147 = vector.extract_strided_slice %146 {offsets = [0, 32], sizes = [2, 16], strides = [1, 1]} : vector<2x64xf32> to vector<2x16xf32>
    %cst_31 = arith.constant 2.000000e+00 : f32
    %148 = vector.broadcast %cst_31 : f32 to vector<2x16xf32>
    %149 = arith.mulf %148, %147 : vector<2x16xf32>
    %cst_32 = arith.constant 1.000000e+00 : f32
    %150 = vector.broadcast %cst_32 : f32 to vector<2x16xf32>
    %151 = arith.subf %149, %150 : vector<2x16xf32>
    %152 = vector.extract_strided_slice %146 {offsets = [0, 16], sizes = [2, 16], strides = [1, 1]} : vector<2x64xf32> to vector<2x16xf32>
    %153 = arith.mulf %152, %135 : vector<2x16xf32>
    %154 = vector.extract_strided_slice %146 {offsets = [0, 0], sizes = [2, 16], strides = [1, 1]} : vector<2x64xf32> to vector<2x16xf32>
    %155 = arith.mulf %154, %151 : vector<2x16xf32>
    %156 = arith.addf %153, %155 : vector<2x16xf32>
    %157 = vector.extract_strided_slice %146 {offsets = [0, 48], sizes = [2, 16], strides = [1, 1]} : vector<2x64xf32> to vector<2x16xf32>
    %158 = math.tanh %156 : vector<2x16xf32>
    %159 = arith.mulf %157, %158 : vector<2x16xf32>
    %160 = arith.truncf %159 : vector<2x16xf32> to vector<2x16xbf16>
    %cst_33 = arith.constant dense<0.000000e+00> : vector<2x64xf32>
    %161 = tpu.matmul %160, %31, %cst_33 {dimension_numbers = #tpu.dot_dimension_numbers<[1], [0], [0], [1], [0, 0, 1, 1], [], []>} : vector<2x16xbf16>, vector<16x64xbf16>, vector<2x64xf32> -> vector<2x64xf32>
    %162 = arith.addf %27, %161 : vector<2x64xf32>
    %163 = arith.negf %162 : vector<2x64xf32>
    %164 = math.exp %163 : vector<2x64xf32>
    %cst_34 = arith.constant 1.000000e+00 : f32
    %165 = vector.broadcast %cst_34 : f32 to vector<2x64xf32>
    %166 = arith.addf %165, %164 : vector<2x64xf32>
    %167 = arith.divf %165, %166 : vector<2x64xf32>
    %168 = vector.extract_strided_slice %167 {offsets = [0, 32], sizes = [2, 16], strides = [1, 1]} : vector<2x64xf32> to vector<2x16xf32>
    %cst_35 = arith.constant 2.000000e+00 : f32
    %169 = vector.broadcast %cst_35 : f32 to vector<2x16xf32>
    %170 = arith.mulf %169, %168 : vector<2x16xf32>
    %cst_36 = arith.constant 1.000000e+00 : f32
    %171 = vector.broadcast %cst_36 : f32 to vector<2x16xf32>
    %172 = arith.subf %170, %171 : vector<2x16xf32>
    %173 = vector.extract_strided_slice %167 {offsets = [0, 16], sizes = [2, 16], strides = [1, 1]} : vector<2x64xf32> to vector<2x16xf32>
    %174 = arith.mulf %173, %156 : vector<2x16xf32>
    %175 = vector.extract_strided_slice %167 {offsets = [0, 0], sizes = [2, 16], strides = [1, 1]} : vector<2x64xf32> to vector<2x16xf32>
    %176 = arith.mulf %175, %172 : vector<2x16xf32>
    %177 = arith.addf %174, %176 : vector<2x16xf32>
    %178 = vector.extract_strided_slice %167 {offsets = [0, 48], sizes = [2, 16], strides = [1, 1]} : vector<2x64xf32> to vector<2x16xf32>
    %179 = math.tanh %177 : vector<2x16xf32>
    %180 = arith.mulf %178, %179 : vector<2x16xf32>
    %181 = arith.truncf %180 : vector<2x16xf32> to vector<2x16xbf16>
    %cst_37 = arith.constant dense<0.000000e+00> : vector<2x64xf32>
    %182 = tpu.matmul %181, %31, %cst_37 {dimension_numbers = #tpu.dot_dimension_numbers<[1], [0], [0], [1], [0, 0, 1, 1], [], []>} : vector<2x16xbf16>, vector<16x64xbf16>, vector<2x64xf32> -> vector<2x64xf32>
    %183 = arith.addf %30, %182 : vector<2x64xf32>
    %184 = arith.negf %183 : vector<2x64xf32>
    %185 = math.exp %184 : vector<2x64xf32>
    %cst_38 = arith.constant 1.000000e+00 : f32
    %186 = vector.broadcast %cst_38 : f32 to vector<2x64xf32>
    %187 = arith.addf %186, %185 : vector<2x64xf32>
    %188 = arith.divf %186, %187 : vector<2x64xf32>
    %189 = vector.extract_strided_slice %188 {offsets = [0, 32], sizes = [2, 16], strides = [1, 1]} : vector<2x64xf32> to vector<2x16xf32>
    %cst_39 = arith.constant 2.000000e+00 : f32
    %190 = vector.broadcast %cst_39 : f32 to vector<2x16xf32>
    %191 = arith.mulf %190, %189 : vector<2x16xf32>
    %cst_40 = arith.constant 1.000000e+00 : f32
    %192 = vector.broadcast %cst_40 : f32 to vector<2x16xf32>
    %193 = arith.subf %191, %192 : vector<2x16xf32>
    %194 = vector.extract_strided_slice %188 {offsets = [0, 16], sizes = [2, 16], strides = [1, 1]} : vector<2x64xf32> to vector<2x16xf32>
    %195 = arith.mulf %194, %177 : vector<2x16xf32>
    %196 = vector.extract_strided_slice %188 {offsets = [0, 0], sizes = [2, 16], strides = [1, 1]} : vector<2x64xf32> to vector<2x16xf32>
    %197 = arith.mulf %196, %193 : vector<2x16xf32>
    %198 = arith.addf %195, %197 : vector<2x16xf32>
    %199 = vector.extract_strided_slice %188 {offsets = [0, 48], sizes = [2, 16], strides = [1, 1]} : vector<2x64xf32> to vector<2x16xf32>
    %200 = math.tanh %198 : vector<2x16xf32>
    %201 = arith.mulf %199, %200 : vector<2x16xf32>
    %c0_41 = arith.constant 0 : index
    %c0_42 = arith.constant 0 : index
    %202 = vector.load %arg4[%c0_41, %c0_42] : memref<16x8xf32, #tpu.memory_space<vmem>>, vector<16x8xf32>
    %cst_43 = arith.constant dense<0.000000e+00> : vector<2x8xf32>
    %203 = tpu.matmul %201, %202, %cst_43 {dimension_numbers = #tpu.dot_dimension_numbers<[1], [0], [0], [1], [0, 0, 1, 1], [], []>} : vector<2x16xf32>, vector<16x8xf32>, vector<2x8xf32> -> vector<2x8xf32>
    %c0_44 = arith.constant 0 : index
    %c0_45 = arith.constant 0 : index
    %204 = vector.load %arg5[%c0_44, %c0_45] : memref<1x8xf32, #tpu.memory_space<vmem>>, vector<1x8xf32>
    %205 = vector.broadcast %204 : vector<1x8xf32> to vector<2x8xf32>
    %206 = arith.addf %203, %205 : vector<2x8xf32>
    %cst_46 = arith.constant 0.000000e+00 : f32
    %207 = vector.broadcast %cst_46 : f32 to vector<2x8xf32>
    %208 = arith.maximumf %206, %207 : vector<2x8xf32>
    %c0_47 = arith.constant 0 : index
    %c0_48 = arith.constant 0 : index
    %209 = vector.load %arg6[%c0_47, %c0_48] : memref<8x128xf32, #tpu.memory_space<vmem>>, vector<8x128xf32>
    %cst_49 = arith.constant dense<0.000000e+00> : vector<2x128xf32>
    %210 = tpu.matmul %208, %209, %cst_49 {dimension_numbers = #tpu.dot_dimension_numbers<[1], [0], [0], [1], [0, 0, 1, 1], [], []>} : vector<2x8xf32>, vector<8x128xf32>, vector<2x128xf32> -> vector<2x128xf32>
    %c0_50 = arith.constant 0 : index
    %c0_51 = arith.constant 0 : index
    %211 = vector.load %arg7[%c0_50, %c0_51] : memref<1x128xf32, #tpu.memory_space<vmem>>, vector<1x128xf32>
    %212 = vector.broadcast %211 : vector<1x128xf32> to vector<2x128xf32>
    %213 = arith.addf %210, %212 : vector<2x128xf32>
    %c0_52 = arith.constant 0 : index
    %c0_53 = arith.constant 0 : index
    %214 = vector.load %arg8[%c0_52, %c0_53] : memref<2x128xf32, #tpu.memory_space<vmem>>, vector<2x128xf32>
    tpu.vector_store %arg8[%c0_52, %c0_53], %213 {strides = array<i32>} : memref<2x128xf32, #tpu.memory_space<vmem>>, vector<2x128xf32>,
    return
  }
}

</mosaic_0001>

<llo_original>
// kernel: lstm_classifier.1
$region0: #{lstm_classifier.1}
  #allocation0 [shape = 'u32[]', space=smem, size = 0x4, offset = 0x4, fixed_abs, tag = 'smem constant byte address 0x4 - core index']
  #allocation1 [shape = 'u32[144,128]{1,0:T(1,128)}', space=vmem, size = 0x12000, scoped, tag = 'internal scratch']
  %s0 = inlined_call_operand.vmem [shape: f32[16,8], index: 0, kind: input, shape index: {}]
  %s1 = inlined_call_operand.vmem [shape: bf16[8,64], index: 1, kind: input, shape index: {}]
  %s2 = inlined_call_operand.vmem [shape: bf16[16,64], index: 2, kind: input, shape index: {}]
  %s3 = inlined_call_operand.vmem [shape: f32[1,64], index: 3, kind: input, shape index: {}]
  %s4 = inlined_call_operand.vmem [shape: f32[16,8], index: 4, kind: input, shape index: {}]
  %s5 = inlined_call_operand.vmem [shape: f32[1,8], index: 5, kind: input, shape index: {}]
  %s6 = inlined_call_operand.vmem [shape: f32[8,128], index: 6, kind: input, shape index: {}]
  %s7 = inlined_call_operand.hbm [shape: f32[1,128], index: 7, kind: input, shape index: {}]
  %s8 = inlined_call_operand.hbm [shape: f32[2,128], index: 8, kind: output, shape index: {}]
  %s9 = sld [smem:[#allocation0]]
  $region46: #{lstm_classifier.1} parent=0
    _
  %s11 = ssub.s32 1, %s9
  %s12 = scalar_select 0, %s11, %s9
  $region1: #{lstm_classifier.1} parent=0
    #allocation2 [shape = 'u8[512]{0}', space=vmem, size = 0x400, scoped, tag = 'input window, operand 7, single buffered']
    #allocation3 [shape = 's32[1]{0}', space=sflag, size = 0x4, scoped, tag = 'scoped memory for lstm_classifier.1']
    #allocation4 [shape = 's32[1]{0}', space=sflag, size = 0x4, scoped, tag = 'scoped memory for lstm_classifier.1']
    #allocation5 [shape = 'u8[1024]{0}', space=vmem, size = 0x400, scoped, tag = 'output window, operand 0, single buffered']
    %13 = vsyncpa [#allocation3], 0
    %14 = vsyncpa [#allocation4], 0
    // Predicated region
    $region2: #{lstm_classifier.1} parent=1 // pred_check
      _
    $region3: #{lstm_classifier.1} parent=1 // pred_check_branch
      %16 = sbr.rel (0) target = $region5
    $region4: #{lstm_classifier.1} parent=1 // pred_region
      _
    $region5: #{lstm_classifier.1} parent=1 // pred_fallthru
      _
    // Predicated region
    $region6: #{lstm_classifier.1} parent=1 // pred_check
      _
    $region7: #{lstm_classifier.1} parent=1 // pred_check_branch
      %18 = sbr.rel (0) target = $region9
    $region8: #{lstm_classifier.1} parent=1 // pred_region
      _
    $region9: #{lstm_classifier.1} parent=1 // pred_fallthru
      _
    // Predicated region
    $region10: #{lstm_classifier.1} parent=1 // pred_check
      _
    $region11: #{lstm_classifier.1} parent=1 // pred_check_branch
      %20 = sbr.rel (0) target = $region13
    $region12: #{lstm_classifier.1} parent=1 // pred_region
      _
    $region13: #{lstm_classifier.1} parent=1 // pred_fallthru
      _
    // Predicated region
    $region14: #{lstm_classifier.1} parent=1 // pred_check
      _
    $region15: #{lstm_classifier.1} parent=1 // pred_check_branch
      %22 = sbr.rel (0) target = $region17
    $region16: #{lstm_classifier.1} parent=1 // pred_region
      _
    $region17: #{lstm_classifier.1} parent=1 // pred_fallthru
      _
    // Predicated region
    $region18: #{lstm_classifier.1} parent=1 // pred_check
      _
    $region19: #{lstm_classifier.1} parent=1 // pred_check_branch
      %24 = sbr.rel (0) target = $region21
    $region20: #{lstm_classifier.1} parent=1 // pred_region
      _
    $region21: #{lstm_classifier.1} parent=1 // pred_fallthru
      _
    // Predicated region
    $region22: #{lstm_classifier.1} parent=1 // pred_check
      _
    $region23: #{lstm_classifier.1} parent=1 // pred_check_branch
      %26 = sbr.rel (0) target = $region25
    $region24: #{lstm_classifier.1} parent=1 // pred_region
      _
    $region25: #{lstm_classifier.1} parent=1 // pred_fallthru
      _
    // Predicated region
    $region26: #{lstm_classifier.1} parent=1 // pred_check
      _
    $region27: #{lstm_classifier.1} parent=1 // pred_check_branch
      %28 = sbr.rel (0) target = $region29
    $region28: #{lstm_classifier.1} parent=1 // pred_region
      _
    $region29: #{lstm_classifier.1} parent=1 // pred_fallthru
      _
    // Predicated region
    $region30: #{lstm_classifier.1} parent=1 // pred_check
      _
    $region31: #{lstm_classifier.1} parent=1 // pred_check_branch
      %30 = sbr.rel (0) target = $region33
    $region32: #{lstm_classifier.1} parent=1 // pred_region
      %s32 = ssub.s32 16, 16
      %33 = vsyncadd [#allocation3], %s32
      %s35 = sshll.u32 [#allocation2], 4
      %s36 = int_to_ptr.vmem [resolvable:$true] %s35
      %38 = dma.hbm_to_vmem [thread:$0]  %s7, 16, %s36, [#allocation3]
    $region33: #{lstm_classifier.1} parent=1 // pred_fallthru
      _
    // Predicated region
    $region34: #{lstm_classifier.1} parent=1 // pred_check
      _
    $region35: #{lstm_classifier.1} parent=1 // pred_check_branch
      %40 = sbr.rel (0) target = $region37
    $region36: #{lstm_classifier.1} parent=1 // pred_region
      %41 = dma.done [#allocation3], 16
    $region37: #{lstm_classifier.1} parent=1 // pred_fallthru
      _
    %v43 = vld [vmem:[%s0] sm:$0xff]
    %v44 = vld [vmem:[%s0 + $0x8] sm:$0xff]
    %v45 = vpack.c.bf16 %v44, %v43
    %v46 = vld [vmem:[%s1] sm:$0xf]
    %v47 = vld [vmem:[%s3] sm:$0x1]
    %v49 = vlaneseq
    %v50 = vshrl.u32 %v49, 7
    %v51 = vsub.s32 0, %v50
    %v52 = vrot.slane %v47, %v51
    %vm54 = vcmask 64512
    %v56 = vsel %vm54, %v45, 0
    %vm58 = vcmask 1043456
    %v60 = vsel %vm58, %v46, 0
    %62 = vmatprep.subr.bf16.mxu0 0
    %63 = vmatpush1.bf16.msra.mxu0 %v60
    %64 = vmatprep.subr.bf16.mxu0 0
    %65 = vmatpush1.bf16.msra.mxu0 0
    %66 = vmatprep.subr.bf16.mxu0 0
    %67 = vmatpush1.bf16.msra.mxu0 0
    %68 = vmatprep.subr.bf16.mxu0 0
    %69 = vmatpush1.bf16.msra.mxu0 0
    %70 = vmatprep.subr.bf16.mxu0 0
    %71 = vmatpush1.bf16.msra.mxu0 0
    %72 = vmatprep.subr.bf16.mxu0 0
    %73 = vmatpush1.bf16.msra.mxu0 0
    %74 = vmatprep.subr.bf16.mxu0 0
    %75 = vmatpush1.bf16.msra.mxu0 0
    %76 = vmatprep.subr.bf16.mxu0 0
    %77 = vmatpush1.bf16.msra.mxu0 0
    %78 = vmatprep.subr.bf16.mxu0 0
    %79 = vmatpush1.bf16.msra.mxu0 0
    %80 = vmatprep.subr.bf16.mxu0 0
    %81 = vmatpush1.bf16.msra.mxu0 0
    %82 = vmatprep.subr.bf16.mxu0 0
    %83 = vmatpush1.bf16.msra.mxu0 0
    %84 = vmatprep.subr.bf16.mxu0 0
    %85 = vmatpush1.bf16.msra.mxu0 0
    %86 = vmatprep.subr.bf16.mxu0 0
    %87 = vmatpush1.bf16.msra.mxu0 0
    %88 = vmatprep.subr.bf16.mxu0 0
    %89 = vmatpush1.bf16.msra.mxu0 0
    %90 = vmatprep.subr.bf16.mxu0 0
    %91 = vmatpush1.bf16.msra.mxu0 0
    %92 = vmatprep.subr.bf16.mxu0 0
    %93 = vmatpush1.bf16.msra.mxu0 0
    %94 = vmatprep.mubr.bf16.mxu0 0
    %95 = vmatmul.mubr.bf16.gmra.mrb[0].mxu0 %v56
    %v96 = vpop.f32.mrb[0].mxu0
    %v97 = vadd.f32 %v52, %v96
    %v98 = vpop.f32.mrb[0].mxu0
    %v99 = vpop.f32.mrb[0].mxu0
    %v100 = vadd.f32 %v52, %v99
    %v101 = vpop.f32.mrb[0].mxu0
    %102 = vdwg.mxu0
    %v104 = vrot.slane %v100, 7
    %vm106 = vcmask 1040384
    %v107 = vsel %vm106, %v97, %v104
    %v109 = vrot.slane %v97, 1
    %v111 = vsel %vm106, %v109, %v100
    %v112 = vrot.slane %v97, 2
    %v114 = vrot.slane %v100, 1
    %v116 = vsel %vm106, %v112, %v114
    %v117 = vrot.slane %v97, 3
    %v119 = vrot.slane %v100, 2
    %v121 = vsel %vm106, %v117, %v119
    %v122 = vrot.slane %v97, 4
    %v124 = vrot.slane %v100, 3
    %v126 = vsel %vm106, %v122, %v124
    %v127 = vrot.slane %v97, 5
    %v129 = vrot.slane %v100, 4
    %v131 = vsel %vm106, %v127, %v129
    %v132 = vrot.slane %v97, 6
    %v134 = vrot.slane %v100, 5
    %v136 = vsel %vm106, %v132, %v134
    %v137 = vrot.slane %v97, 7
    %v139 = vrot.slane %v100, 6
    %v141 = vsel %vm106, %v137, %v139
    %v142 = vld [vmem:[%s2] sm:$0xf]
    %v143 = vld [vmem:[%s2 + $0x4] sm:$0xf]
    %v146 = vunpack.c.l.b16 %v142
    %v147 = vunpack.c.l.b16 %v143
    %v148 = vpack.c.b16 %v147, %v146
    %vm150 = vcmask 130048
    %v152 = vsel %vm150, 0, 0
    %154 = vmatprep.subr.bf16.mxu0 0
    %155 = vmatpush1.bf16.msra.mxu0 %v148
    %156 = vmatprep.subr.bf16.mxu0 0
    %157 = vmatpush1.bf16.msra.mxu0 0
    %158 = vmatprep.subr.bf16.mxu0 0
    %159 = vmatpush1.bf16.msra.mxu0 0
    %160 = vmatprep.subr.bf16.mxu0 0
    %161 = vmatpush1.bf16.msra.mxu0 0
    %162 = vmatprep.subr.bf16.mxu0 0
    %163 = vmatpush1.bf16.msra.mxu0 0
    %164 = vmatprep.subr.bf16.mxu0 0
    %165 = vmatpush1.bf16.msra.mxu0 0
    %166 = vmatprep.subr.bf16.mxu0 0
    %167 = vmatpush1.bf16.msra.mxu0 0
    %168 = vmatprep.subr.bf16.mxu0 0
    %169 = vmatpush1.bf16.msra.mxu0 0
    %170 = vmatprep.subr.bf16.mxu0 0
    %171 = vmatpush1.bf16.msra.mxu0 0
    %172 = vmatprep.subr.bf16.mxu0 0
    %173 = vmatpush1.bf16.msra.mxu0 0
    %174 = vmatprep.subr.bf16.mxu0 0
    %175 = vmatpush1.bf16.msra.mxu0 0
    %176 = vmatprep.subr.bf16.mxu0 0
    %177 = vmatpush1.bf16.msra.mxu0 0
    %178 = vmatprep.subr.bf16.mxu0 0
    %179 = vmatpush1.bf16.msra.mxu0 0
    %180 = vmatprep.subr.bf16.mxu0 0
    %181 = vmatpush1.bf16.msra.mxu0 0
    %182 = vmatprep.subr.bf16.mxu0 0
    %183 = vmatpush1.bf16.msra.mxu0 0
    %184 = vmatprep.subr.bf16.mxu0 0
    %185 = vmatpush1.bf16.msra.mxu0 0
    %186 = vmatprep.mubr.bf16.mxu0 0
    %187 = vmatmul.mubr.bf16.gmra.mrb[0].mxu0 %v152
    %v188 = vpop.f32.mrb[0].mxu0
    %v189 = vadd.f32 0.0, %v188
    %v190 = vpop.f32.mrb[0].mxu0
    %v191 = vpop.f32.mrb[0].mxu0
    %v192 = vpop.f32.mrb[0].mxu0
    %193 = vdwg.mxu0
    %v194 = vadd.f32 %v107, %v189
    %v195 = vxor.u32 %v194, 2147483648
    %v196 = vmul.f32 %v195, 1.442695
    %v197 = vpow.pop %v196
    %v198 = vadd.f32 %v197, 1.0
    %v199 = vrcp.pop %v198
    %v200 = vmul.f32 1.0, %v199
    %v201 = vmul.f32 %v200, 2.0
    %v202 = vsub.f32 %v201, 1.0
    %v203 = vmul.f32 %v200, 0.0
    %205 = vrot.lane.b32.xlu0 %v202, 96
    %v206 = vpop.permute.xlu0 %205
    %v208 = vmul.f32 %v200, %v206
    %210 = vrot.lane.b32.xlu0 %v208, 16
    %v211 = vpop.permute.xlu0 %210
    %v213 = vadd.f32 %v203, %v211
    %v214 = vtanh.pop %v213
    %216 = vrot.lane.b32.xlu0 %v214, 32
    %v217 = vpop.permute.xlu0 %216
    %v219 = vmul.f32 %v200, %v217
    %v220 = vpack.c.bf16 %v219, %v219
    %222 = vrot.lane.b32.xlu0 %v220, 80
    %v223 = vpop.permute.xlu0 %222
    %v225 = vsel %vm150, %v223, 0
    %227 = vmatprep.subr.bf16.mxu0 0
    %228 = vmatpush1.bf16.msra.mxu0 %v148
    %229 = vmatprep.subr.bf16.mxu0 0
    %230 = vmatpush1.bf16.msra.mxu0 0
    %231 = vmatprep.subr.bf16.mxu0 0
    %232 = vmatpush1.bf16.msra.mxu0 0
    %233 = vmatprep.subr.bf16.mxu0 0
    %234 = vmatpush1.bf16.msra.mxu0 0
    %235 = vmatprep.subr.bf16.mxu0 0
    %236 = vmatpush1.bf16.msra.mxu0 0
    %237 = vmatprep.subr.bf16.mxu0 0
    %238 = vmatpush1.bf16.msra.mxu0 0
    %239 = vmatprep.subr.bf16.mxu0 0
    %240 = vmatpush1.bf16.msra.mxu0 0
    %241 = vmatprep.subr.bf16.mxu0 0
    %242 = vmatpush1.bf16.msra.mxu0 0
    %243 = vmatprep.subr.bf16.mxu0 0
    %244 = vmatpush1.bf16.msra.mxu0 0
    %245 = vmatprep.subr.bf16.mxu0 0
    %246 = vmatpush1.bf16.msra.mxu0 0
    %247 = vmatprep.subr.bf16.mxu0 0
    %248 = vmatpush1.bf16.msra.mxu0 0
    %249 = vmatprep.subr.bf16.mxu0 0
    %250 = vmatpush1.bf16.msra.mxu0 0
    %251 = vmatprep.subr.bf16.mxu0 0
    %252 = vmatpush1.bf16.msra.mxu0 0
    %253 = vmatprep.subr.bf16.mxu0 0
    %254 = vmatpush1.bf16.msra.mxu0 0
    %255 = vmatprep.subr.bf16.mxu0 0
    %256 = vmatpush1.bf16.msra.mxu0 0
    %257 = vmatprep.subr.bf16.mxu0 0
    %258 = vmatpush1.bf16.msra.mxu0 0
    %259 = vmatprep.mubr.bf16.mxu0 0
    %260 = vmatmul.mubr.bf16.gmra.mrb[0].mxu0 %v225
    %v261 = vpop.f32.mrb[0].mxu0
    %v262 = vadd.f32 0.0, %v261
    %v263 = vpop.f32.mrb[0].mxu0
    %v264 = vpop.f32.mrb[0].mxu0
    %v265 = vpop.f32.mrb[0].mxu0
    %266 = vdwg.mxu0
    %v267 = vadd.f32 %v111, %v262
    %v268 = vxor.u32 %v267, 2147483648
    %v269 = vmul.f32 %v268, 1.442695
    %v270 = vpow.pop %v269
    %v271 = vadd.f32 %v270, 1.0
    %v272 = vrcp.pop %v271
    %v273 = vmul.f32 1.0, %v272
    %v274 = vmul.f32 %v273, 2.0
    %v275 = vsub.f32 %v274, 1.0
    %v276 = vmul.f32 %v273, %v213
    %278 = vrot.lane.b32.xlu0 %v275, 96
    %v279 = vpop.permute.xlu0 %278
    %v281 = vmul.f32 %v273, %v279
    %283 = vrot.lane.b32.xlu0 %v281, 16
    %v284 = vpop.permute.xlu0 %283
    %v286 = vadd.f32 %v276, %v284
    %v287 = vtanh.pop %v286
    %289 = vrot.lane.b32.xlu0 %v287, 32
    %v290 = vpop.permute.xlu0 %289
    %v292 = vmul.f32 %v273, %v290
    %v293 = vpack.c.bf16 %v292, %v292
    %295 = vrot.lane.b32.xlu0 %v293, 80
    %v296 = vpop.permute.xlu0 %295
    %v298 = vsel %vm150, %v296, 0
    %300 = vmatprep.subr.bf16.mxu0 0
    %301 = vmatpush1.bf16.msra.mxu0 %v148
    %302 = vmatprep.subr.bf16.mxu0 0
    %303 = vmatpush1.bf16.msra.mxu0 0
    %304 = vmatprep.subr.bf16.mxu0 0
    %305 = vmatpush1.bf16.msra.mxu0 0
    %306 = vmatprep.subr.bf16.mxu0 0
    %307 = vmatpush1.bf16.msra.mxu0 0
    %308 = vmatprep.subr.bf16.mxu0 0
    %309 = vmatpush1.bf16.msra.mxu0 0
    %310 = vmatprep.subr.bf16.mxu0 0
    %311 = vmatpush1.bf16.msra.mxu0 0
    %312 = vmatprep.subr.bf16.mxu0 0
    %313 = vmatpush1.bf16.msra.mxu0 0
    %314 = vmatprep.subr.bf16.mxu0 0
    %315 = vmatpush1.bf16.msra.mxu0 0
    %316 = vmatprep.subr.bf16.mxu0 0
    %317 = vmatpush1.bf16.msra.mxu0 0
    %318 = vmatprep.subr.bf16.mxu0 0
    %319 = vmatpush1.bf16.msra.mxu0 0
    %320 = vmatprep.subr.bf16.mxu0 0
    %321 = vmatpush1.bf16.msra.mxu0 0
    %322 = vmatprep.subr.bf16.mxu0 0
    %323 = vmatpush1.bf16.msra.mxu0 0
    %324 = vmatprep.subr.bf16.mxu0 0
    %325 = vmatpush1.bf16.msra.mxu0 0
    %326 = vmatprep.subr.bf16.mxu0 0
    %327 = vmatpush1.bf16.msra.mxu0 0
    %328 = vmatprep.subr.bf16.mxu0 0
    %329 = vmatpush1.bf16.msra.mxu0 0
    %330 = vmatprep.subr.bf16.mxu0 0
    %331 = vmatpush1.bf16.msra.mxu0 0
    %332 = vmatprep.mubr.bf16.mxu0 0
    %333 = vmatmul.mubr.bf16.gmra.mrb[0].mxu0 %v298
    %v334 = vpop.f32.mrb[0].mxu0
    %v335 = vadd.f32 0.0, %v334
    %v336 = vpop.f32.mrb[0].mxu0
    %v337 = vpop.f32.mrb[0].mxu0
    %v338 = vpop.f32.mrb[0].mxu0
    %339 = vdwg.mxu0
    %v340 = vadd.f32 %v116, %v335
    %v341 = vxor.u32 %v340, 2147483648
    %v342 = vmul.f32 %v341, 1.442695
    %v343 = vpow.pop %v342
    %v344 = vadd.f32 %v343, 1.0
    %v345 = vrcp.pop %v344
    %v346 = vmul.f32 1.0, %v345
    %v347 = vmul.f32 %v346, 2.0
    %v348 = vsub.f32 %v347, 1.0
    %v349 = vmul.f32 %v346, %v286
    %351 = vrot.lane.b32.xlu0 %v348, 96
    %v352 = vpop.permute.xlu0 %351
    %v354 = vmul.f32 %v346, %v352
    %356 = vrot.lane.b32.xlu0 %v354, 16
    %v357 = vpop.permute.xlu0 %356
    %v359 = vadd.f32 %v349, %v357
    %v360 = vtanh.pop %v359
    %362 = vrot.lane.b32.xlu0 %v360, 32
    %v363 = vpop.permute.xlu0 %362
    %v365 = vmul.f32 %v346, %v363
    %v366 = vpack.c.bf16 %v365, %v365
    %368 = vrot.lane.b32.xlu0 %v366, 80
    %v369 = vpop.permute.xlu0 %368
    %v371 = vsel %vm150, %v369, 0
    %373 = vmatprep.subr.bf16.mxu0 0
    %374 = vmatpush1.bf16.msra.mxu0 %v148
    %375 = vmatprep.subr.bf16.mxu0 0
    %376 = vmatpush1.bf16.msra.mxu0 0
    %377 = vmatprep.subr.bf16.mxu0 0
    %378 = vmatpush1.bf16.msra.mxu0 0
    %379 = vmatprep.subr.bf16.mxu0 0
    %380 = vmatpush1.bf16.msra.mxu0 0
    %381 = vmatprep.subr.bf16.mxu0 0
    %382 = vmatpush1.bf16.msra.mxu0 0
    %383 = vmatprep.subr.bf16.mxu0 0
    %384 = vmatpush1.bf16.msra.mxu0 0
    %385 = vmatprep.subr.bf16.mxu0 0
    %386 = vmatpush1.bf16.msra.mxu0 0
    %387 = vmatprep.subr.bf16.mxu0 0
    %388 = vmatpush1.bf16.msra.mxu0 0
    %389 = vmatprep.subr.bf16.mxu0 0
    %390 = vmatpush1.bf16.msra.mxu0 0
    %391 = vmatprep.subr.bf16.mxu0 0
    %392 = vmatpush1.bf16.msra.mxu0 0
    %393 = vmatprep.subr.bf16.mxu0 0
    %394 = vmatpush1.bf16.msra.mxu0 0
    %395 = vmatprep.subr.bf16.mxu0 0
    %396 = vmatpush1.bf16.msra.mxu0 0
    %397 = vmatprep.subr.bf16.mxu0 0
    %398 = vmatpush1.bf16.msra.mxu0 0
    %399 = vmatprep.subr.bf16.mxu0 0
    %400 = vmatpush1.bf16.msra.mxu0 0
    %401 = vmatprep.subr.bf16.mxu0 0
    %402 = vmatpush1.bf16.msra.mxu0 0
    %403 = vmatprep.subr.bf16.mxu0 0
    %404 = vmatpush1.bf16.msra.mxu0 0
    %405 = vmatprep.mubr.bf16.mxu0 0
    %406 = vmatmul.mubr.bf16.gmra.mrb[0].mxu0 %v371
    %v407 = vpop.f32.mrb[0].mxu0
    %v408 = vadd.f32 0.0, %v407
    %v409 = vpop.f32.mrb[0].mxu0
    %v410 = vpop.f32.mrb[0].mxu0
    %v411 = vpop.f32.mrb[0].mxu0
    %412 = vdwg.mxu0
    %v413 = vadd.f32 %v121, %v408
    %v414 = vxor.u32 %v413, 2147483648
    %v415 = vmul.f32 %v414, 1.442695
    %v416 = vpow.pop %v415
    %v417 = vadd.f32 %v416, 1.0
    %v418 = vrcp.pop %v417
    %v419 = vmul.f32 1.0, %v418
    %v420 = vmul.f32 %v419, 2.0
    %v421 = vsub.f32 %v420, 1.0
    %v422 = vmul.f32 %v419, %v359
    %424 = vrot.lane.b32.xlu0 %v421, 96
    %v425 = vpop.permute.xlu0 %424
    %v427 = vmul.f32 %v419, %v425
    %429 = vrot.lane.b32.xlu0 %v427, 16
    %v430 = vpop.permute.xlu0 %429
    %v432 = vadd.f32 %v422, %v430
    %v433 = vtanh.pop %v432
    %435 = vrot.lane.b32.xlu0 %v433, 32
    %v436 = vpop.permute.xlu0 %435
    %v438 = vmul.f32 %v419, %v436
    %v439 = vpack.c.bf16 %v438, %v438
    %441 = vrot.lane.b32.xlu0 %v439, 80
    %v442 = vpop.permute.xlu0 %441
    %v444 = vsel %vm150, %v442, 0
    %446 = vmatprep.subr.bf16.mxu0 0
    %447 = vmatpush1.bf16.msra.mxu0 %v148
    %448 = vmatprep.subr.bf16.mxu0 0
    %449 = vmatpush1.bf16.msra.mxu0 0
    %450 = vmatprep.subr.bf16.mxu0 0
    %451 = vmatpush1.bf16.msra.mxu0 0
    %452 = vmatprep.subr.bf16.mxu0 0
    %453 = vmatpush1.bf16.msra.mxu0 0
    %454 = vmatprep.subr.bf16.mxu0 0
    %455 = vmatpush1.bf16.msra.mxu0 0
    %456 = vmatprep.subr.bf16.mxu0 0
    %457 = vmatpush1.bf16.msra.mxu0 0
    %458 = vmatprep.subr.bf16.mxu0 0
    %459 = vmatpush1.bf16.msra.mxu0 0
    %460 = vmatprep.subr.bf16.mxu0 0
    %461 = vmatpush1.bf16.msra.mxu0 0
    %462 = vmatprep.subr.bf16.mxu0 0
    %463 = vmatpush1.bf16.msra.mxu0 0
    %464 = vmatprep.subr.bf16.mxu0 0
    %465 = vmatpush1.bf16.msra.mxu0 0
    %466 = vmatprep.subr.bf16.mxu0 0
    %467 = vmatpush1.bf16.msra.mxu0 0
    %468 = vmatprep.subr.bf16.mxu0 0
    %469 = vmatpush1.bf16.msra.mxu0 0
    %470 = vmatprep.subr.bf16.mxu0 0
    %471 = vmatpush1.bf16.msra.mxu0 0
    %472 = vmatprep.subr.bf16.mxu0 0
    %473 = vmatpush1.bf16.msra.mxu0 0
    %474 = vmatprep.subr.bf16.mxu0 0
    %475 = vmatpush1.bf16.msra.mxu0 0
    %476 = vmatprep.subr.bf16.mxu0 0
    %477 = vmatpush1.bf16.msra.mxu0 0
    %478 = vmatprep.mubr.bf16.mxu0 0
    %479 = vmatmul.mubr.bf16.gmra.mrb[0].mxu0 %v444
    %v480 = vpop.f32.mrb[0].mxu0
    %v481 = vadd.f32 0.0, %v480
    %v482 = vpop.f32.mrb[0].mxu0
    %v483 = vpop.f32.mrb[0].mxu0
    %v484 = vpop.f32.mrb[0].mxu0
    %485 = vdwg.mxu0
    %v486 = vadd.f32 %v126, %v481
    %v487 = vxor.u32 %v486, 2147483648
    %v488 = vmul.f32 %v487, 1.442695
    %v489 = vpow.pop %v488
    %v490 = vadd.f32 %v489, 1.0
    %v491 = vrcp.pop %v490
    %v492 = vmul.f32 1.0, %v491
    %v493 = vmul.f32 %v492, 2.0
    %v494 = vsub.f32 %v493, 1.0
    %v495 = vmul.f32 %v492, %v432
    %497 = vrot.lane.b32.xlu0 %v494, 96
    %v498 = vpop.permute.xlu0 %497
    %v500 = vmul.f32 %v492, %v498
    %502 = vrot.lane.b32.xlu0 %v500, 16
    %v503 = vpop.permute.xlu0 %502
    %v505 = vadd.f32 %v495, %v503
    %v506 = vtanh.pop %v505
    %508 = vrot.lane.b32.xlu0 %v506, 32
    %v509 = vpop.permute.xlu0 %508
    %v511 = vmul.f32 %v492, %v509
    %v512 = vpack.c.bf16 %v511, %v511
    %514 = vrot.lane.b32.xlu0 %v512, 80
    %v515 = vpop.permute.xlu0 %514
    %v517 = vsel %vm150, %v515, 0
    %519 = vmatprep.subr.bf16.mxu0 0
    %520 = vmatpush1.bf16.msra.mxu0 %v148
    %521 = vmatprep.subr.bf16.mxu0 0
    %522 = vmatpush1.bf16.msra.mxu0 0
    %523 = vmatprep.subr.bf16.mxu0 0
    %524 = vmatpush1.bf16.msra.mxu0 0
    %525 = vmatprep.subr.bf16.mxu0 0
    %526 = vmatpush1.bf16.msra.mxu0 0
    %527 = vmatprep.subr.bf16.mxu0 0
    %528 = vmatpush1.bf16.msra.mxu0 0
    %529 = vmatprep.subr.bf16.mxu0 0
    %530 = vmatpush1.bf16.msra.mxu0 0
    %531 = vmatprep.subr.bf16.mxu0 0
    %532 = vmatpush1.bf16.msra.mxu0 0
    %533 = vmatprep.subr.bf16.mxu0 0
    %534 = vmatpush1.bf16.msra.mxu0 0
    %535 = vmatprep.subr.bf16.mxu0 0
    %536 = vmatpush1.bf16.msra.mxu0 0
    %537 = vmatprep.subr.bf16.mxu0 0
    %538 = vmatpush1.bf16.msra.mxu0 0
    %539 = vmatprep.subr.bf16.mxu0 0
    %540 = vmatpush1.bf16.msra.mxu0 0
    %541 = vmatprep.subr.bf16.mxu0 0
    %542 = vmatpush1.bf16.msra.mxu0 0
    %543 = vmatprep.subr.bf16.mxu0 0
    %544 = vmatpush1.bf16.msra.mxu0 0
    %545 = vmatprep.subr.bf16.mxu0 0
    %546 = vmatpush1.bf16.msra.mxu0 0
    %547 = vmatprep.subr.bf16.mxu0 0
    %548 = vmatpush1.bf16.msra.mxu0 0
    %549 = vmatprep.subr.bf16.mxu0 0
    %550 = vmatpush1.bf16.msra.mxu0 0
    %551 = vmatprep.mubr.bf16.mxu0 0
    %552 = vmatmul.mubr.bf16.gmra.mrb[0].mxu0 %v517
    %v553 = vpop.f32.mrb[0].mxu0
    %v554 = vadd.f32 0.0, %v553
    %v555 = vpop.f32.mrb[0].mxu0
    %v556 = vpop.f32.mrb[0].mxu0
    %v557 = vpop.f32.mrb[0].mxu0
    %558 = vdwg.mxu0
    %v559 = vadd.f32 %v131, %v554
    %v560 = vxor.u32 %v559, 2147483648
    %v561 = vmul.f32 %v560, 1.442695
    %v562 = vpow.pop %v561
    %v563 = vadd.f32 %v562, 1.0
    %v564 = vrcp.pop %v563
    %v565 = vmul.f32 1.0, %v564
    %v566 = vmul.f32 %v565, 2.0
    %v567 = vsub.f32 %v566, 1.0
    %v568 = vmul.f32 %v565, %v505
    %570 = vrot.lane.b32.xlu0 %v567, 96
    %v571 = vpop.permute.xlu0 %570
    %v573 = vmul.f32 %v565, %v571
    %575 = vrot.lane.b32.xlu0 %v573, 16
    %v576 = vpop.permute.xlu0 %575
    %v578 = vadd.f32 %v568, %v576
    %v579 = vtanh.pop %v578
    %581 = vrot.lane.b32.xlu0 %v579, 32
    %v582 = vpop.permute.xlu0 %581
    %v584 = vmul.f32 %v565, %v582
    %v585 = vpack.c.bf16 %v584, %v584
    %587 = vrot.lane.b32.xlu0 %v585, 80
    %v588 = vpop.permute.xlu0 %587
    %v590 = vsel %vm150, %v588, 0
    %592 = vmatprep.subr.bf16.mxu0 0
    %593 = vmatpush1.bf16.msra.mxu0 %v148
    %594 = vmatprep.subr.bf16.mxu0 0
    %595 = vmatpush1.bf16.msra.mxu0 0
    %596 = vmatprep.subr.bf16.mxu0 0
    %597 = vmatpush1.bf16.msra.mxu0 0
    %598 = vmatprep.subr.bf16.mxu0 0
    %599 = vmatpush1.bf16.msra.mxu0 0
    %600 = vmatprep.subr.bf16.mxu0 0
    %601 = vmatpush1.bf16.msra.mxu0 0
    %602 = vmatprep.subr.bf16.mxu0 0
    %603 = vmatpush1.bf16.msra.mxu0 0
    %604 = vmatprep.subr.bf16.mxu0 0
    %605 = vmatpush1.bf16.msra.mxu0 0
    %606 = vmatprep.subr.bf16.mxu0 0
    %607 = vmatpush1.bf16.msra.mxu0 0
    %608 = vmatprep.subr.bf16.mxu0 0
    %609 = vmatpush1.bf16.msra.mxu0 0
    %610 = vmatprep.subr.bf16.mxu0 0
    %611 = vmatpush1.bf16.msra.mxu0 0
    %612 = vmatprep.subr.bf16.mxu0 0
    %613 = vmatpush1.bf16.msra.mxu0 0
    %614 = vmatprep.subr.bf16.mxu0 0
    %615 = vmatpush1.bf16.msra.mxu0 0
    %616 = vmatprep.subr.bf16.mxu0 0
    %617 = vmatpush1.bf16.msra.mxu0 0
    %618 = vmatprep.subr.bf16.mxu0 0
    %619 = vmatpush1.bf16.msra.mxu0 0
    %620 = vmatprep.subr.bf16.mxu0 0
    %621 = vmatpush1.bf16.msra.mxu0 0
    %622 = vmatprep.subr.bf16.mxu0 0
    %623 = vmatpush1.bf16.msra.mxu0 0
    %624 = vmatprep.mubr.bf16.mxu0 0
    %625 = vmatmul.mubr.bf16.gmra.mrb[0].mxu0 %v590
    %v626 = vpop.f32.mrb[0].mxu0
    %v627 = vadd.f32 0.0, %v626
    %v628 = vpop.f32.mrb[0].mxu0
    %v629 = vpop.f32.mrb[0].mxu0
    %v630 = vpop.f32.mrb[0].mxu0
    %631 = vdwg.mxu0
    %v632 = vadd.f32 %v136, %v627
    %v633 = vxor.u32 %v632, 2147483648
    %v634 = vmul.f32 %v633, 1.442695
    %v635 = vpow.pop %v634
    %v636 = vadd.f32 %v635, 1.0
    %v637 = vrcp.pop %v636
    %v638 = vmul.f32 1.0, %v637
    %v639 = vmul.f32 %v638, 2.0
    %v640 = vsub.f32 %v639, 1.0
    %v641 = vmul.f32 %v638, %v578
    %643 = vrot.lane.b32.xlu0 %v640, 96
    %v644 = vpop.permute.xlu0 %643
    %v646 = vmul.f32 %v638, %v644
    %648 = vrot.lane.b32.xlu0 %v646, 16
    %v649 = vpop.permute.xlu0 %648
    %v651 = vadd.f32 %v641, %v649
    %v652 = vtanh.pop %v651
    %654 = vrot.lane.b32.xlu0 %v652, 32
    %v655 = vpop.permute.xlu0 %654
    %v657 = vmul.f32 %v638, %v655
    %v658 = vpack.c.bf16 %v657, %v657
    %660 = vrot.lane.b32.xlu0 %v658, 80
    %v661 = vpop.permute.xlu0 %660
    %v663 = vsel %vm150, %v661, 0
    %665 = vmatprep.subr.bf16.mxu0 0
    %666 = vmatpush1.bf16.msra.mxu0 %v148
    %667 = vmatprep.subr.bf16.mxu0 0
    %668 = vmatpush1.bf16.msra.mxu0 0
    %669 = vmatprep.subr.bf16.mxu0 0
    %670 = vmatpush1.bf16.msra.mxu0 0
    %671 = vmatprep.subr.bf16.mxu0 0
    %672 = vmatpush1.bf16.msra.mxu0 0
    %673 = vmatprep.subr.bf16.mxu0 0
    %674 = vmatpush1.bf16.msra.mxu0 0
    %675 = vmatprep.subr.bf16.mxu0 0
    %676 = vmatpush1.bf16.msra.mxu0 0
    %677 = vmatprep.subr.bf16.mxu0 0
    %678 = vmatpush1.bf16.msra.mxu0 0
    %679 = vmatprep.subr.bf16.mxu0 0
    %680 = vmatpush1.bf16.msra.mxu0 0
    %681 = vmatprep.subr.bf16.mxu0 0
    %682 = vmatpush1.bf16.msra.mxu0 0
    %683 = vmatprep.subr.bf16.mxu0 0
    %684 = vmatpush1.bf16.msra.mxu0 0
    %685 = vmatprep.subr.bf16.mxu0 0
    %686 = vmatpush1.bf16.msra.mxu0 0
    %687 = vmatprep.subr.bf16.mxu0 0
    %688 = vmatpush1.bf16.msra.mxu0 0
    %689 = vmatprep.subr.bf16.mxu0 0
    %690 = vmatpush1.bf16.msra.mxu0 0
    %691 = vmatprep.subr.bf16.mxu0 0
    %692 = vmatpush1.bf16.msra.mxu0 0
    %693 = vmatprep.subr.bf16.mxu0 0
    %694 = vmatpush1.bf16.msra.mxu0 0
    %695 = vmatprep.subr.bf16.mxu0 0
    %696 = vmatpush1.bf16.msra.mxu0 0
    %697 = vmatprep.mubr.bf16.mxu0 0
    %698 = vmatmul.mubr.bf16.gmra.mrb[0].mxu0 %v663
    %v699 = vpop.f32.mrb[0].mxu0
    %v700 = vadd.f32 0.0, %v699
    %v701 = vpop.f32.mrb[0].mxu0
    %v702 = vpop.f32.mrb[0].mxu0
    %v703 = vpop.f32.mrb[0].mxu0
    %704 = vdwg.mxu0
    %v705 = vadd.f32 %v141, %v700
    %v706 = vxor.u32 %v705, 2147483648
    %v707 = vmul.f32 %v706, 1.442695
    %v708 = vpow.pop %v707
    %v709 = vadd.f32 %v708, 1.0
    %v710 = vrcp.pop %v709
    %v711 = vmul.f32 1.0, %v710
    %v712 = vmul.f32 %v711, 2.0
    %v713 = vsub.f32 %v712, 1.0
    %v714 = vmul.f32 %v711, %v651
    %716 = vrot.lane.b32.xlu0 %v713, 96
    %v717 = vpop.permute.xlu0 %716
    %v719 = vmul.f32 %v711, %v717
    %721 = vrot.lane.b32.xlu0 %v719, 16
    %v722 = vpop.permute.xlu0 %721
    %v724 = vadd.f32 %v714, %v722
    %v725 = vtanh.pop %v724
    %727 = vrot.lane.b32.xlu0 %v725, 32
    %v728 = vpop.permute.xlu0 %727
    %v730 = vmul.f32 %v711, %v728
    %v731 = vld [vmem:[%s4] sm:$0xff]
    %v732 = vld [vmem:[%s4 + $0x8] sm:$0xff]
    %v733 = vld [vmem:[%s5] sm:$0x1]
    %v735 = vlaneseq
    %v736 = vshrl.u32 %v735, 7
    %v737 = vsub.s32 0, %v736
    %v738 = vrot.slane %v733, %v737
    %741 = vrot.lane.b32.xlu0 %v730, 80
    %v742 = vpop.permute.xlu0 %741
    %v743 = vsel %vm150, %v742, 0
    %745 = vmatprep.subr.mxu0 0.0
    %746 = vmatpush1.msra.mxu0 %v731
    %747 = vmatprep.subr.mxu0 0.0
    %748 = vmatpush1.msra.mxu0 %v732
    %749 = vmatprep.subr.mxu0 0.0
    %750 = vmatpush1.msra.mxu0 0.0
    %751 = vmatprep.subr.mxu0 0.0
    %752 = vmatpush1.msra.mxu0 0.0
    %753 = vmatprep.subr.mxu0 0.0
    %754 = vmatpush1.msra.mxu0 0.0
    %755 = vmatprep.subr.mxu0 0.0
    %756 = vmatpush1.msra.mxu0 0.0
    %757 = vmatprep.subr.mxu0 0.0
    %758 = vmatpush1.msra.mxu0 0.0
    %759 = vmatprep.subr.mxu0 0.0
    %760 = vmatpush1.msra.mxu0 0.0
    %761 = vmatprep.subr.mxu0 0.0
    %762 = vmatpush1.msra.mxu0 0.0
    %763 = vmatprep.subr.mxu0 0.0
    %764 = vmatpush1.msra.mxu0 0.0
    %765 = vmatprep.subr.mxu0 0.0
    %766 = vmatpush1.msra.mxu0 0.0
    %767 = vmatprep.subr.mxu0 0.0
    %768 = vmatpush1.msra.mxu0 0.0
    %769 = vmatprep.subr.mxu0 0.0
    %770 = vmatpush1.msra.mxu0 0.0
    %771 = vmatprep.subr.mxu0 0.0
    %772 = vmatpush1.msra.mxu0 0.0
    %773 = vmatprep.subr.mxu0 0.0
    %774 = vmatpush1.msra.mxu0 0.0
    %775 = vmatprep.subr.mxu0 0.0
    %776 = vmatpush1.msra.mxu0 0.0
    %777 = vmatprep.subr.mxu0 0.0
    %778 = vmatpush1.msra.mxu0 0.0
    %779 = vmatprep.subr.mxu0 0.0
    %780 = vmatpush1.msra.mxu0 0.0
    %781 = vmatprep.subr.mxu0 0.0
    %782 = vmatpush1.msra.mxu0 0.0
    %783 = vmatprep.subr.mxu0 0.0
    %784 = vmatpush1.msra.mxu0 0.0
    %785 = vmatprep.subr.mxu0 0.0
    %786 = vmatpush1.msra.mxu0 0.0
    %787 = vmatprep.subr.mxu0 0.0
    %788 = vmatpush1.msra.mxu0 0.0
    %789 = vmatprep.subr.mxu0 0.0
    %790 = vmatpush1.msra.mxu0 0.0
    %791 = vmatprep.subr.mxu0 0.0
    %792 = vmatpush1.msra.mxu0 0.0
    %793 = vmatprep.subr.mxu0 0.0
    %794 = vmatpush1.msra.mxu0 0.0
    %795 = vmatprep.subr.mxu0 0.0
    %796 = vmatpush1.msra.mxu0 0.0
    %797 = vmatprep.subr.mxu0 0.0
    %798 = vmatpush1.msra.mxu0 0.0
    %799 = vmatprep.subr.mxu0 0.0
    %800 = vmatpush1.msra.mxu0 0.0
    %801 = vmatprep.subr.mxu0 0.0
    %802 = vmatpush1.msra.mxu0 0.0
    %803 = vmatprep.subr.mxu0 0.0
    %804 = vmatpush1.msra.mxu0 0.0
    %805 = vmatprep.subr.mxu0 0.0
    %806 = vmatpush1.msra.mxu0 0.0
    %807 = vmatprep.subr.mxu0 0.0
    %808 = vmatpush1.msra.mxu0 0.0
    %809 = vmatprep.mubr.f32.mxu0 0.0
    %810 = vmatmul.mubr.f32.gmra.mrb[0].mxu0 %v743
    %v811 = vpop.f32.mrb[0].mxu0
    %v812 = vadd.f32 %v738, %v811
    %v813 = vpop.f32.mrb[0].mxu0
    %814 = vdwg.mxu0
    %v815 = vmax.f32 %v812, 0.0
    %v816 = vld [vmem:[%s6] sm:$0xff]
    %v817 = vld [vmem:[#allocation2] sm:$0x1]
    %v819 = vlaneseq
    %v820 = vshrl.u32 %v819, 7
    %v821 = vsub.s32 0, %v820
    %v822 = vrot.slane %v817, %v821
    %v825 = vsel %vm54, %v815, 0
    %827 = vmatprep.subr.mxu0 0.0
    %828 = vmatpush1.msra.mxu0 %v816
    %829 = vmatprep.subr.mxu0 0.0
    %830 = vmatpush1.msra.mxu0 0.0
    %831 = vmatprep.subr.mxu0 0.0
    %832 = vmatpush1.msra.mxu0 0.0
    %833 = vmatprep.subr.mxu0 0.0
    %834 = vmatpush1.msra.mxu0 0.0
    %835 = vmatprep.subr.mxu0 0.0
    %836 = vmatpush1.msra.mxu0 0.0
    %837 = vmatprep.subr.mxu0 0.0
    %838 = vmatpush1.msra.mxu0 0.0
    %839 = vmatprep.subr.mxu0 0.0
    %840 = vmatpush1.msra.mxu0 0.0
    %841 = vmatprep.subr.mxu0 0.0
    %842 = vmatpush1.msra.mxu0 0.0
    %843 = vmatprep.subr.mxu0 0.0
    %844 = vmatpush1.msra.mxu0 0.0
    %845 = vmatprep.subr.mxu0 0.0
    %846 = vmatpush1.msra.mxu0 0.0
    %847 = vmatprep.subr.mxu0 0.0
    %848 = vmatpush1.msra.mxu0 0.0
    %849 = vmatprep.subr.mxu0 0.0
    %850 = vmatpush1.msra.mxu0 0.0
    %851 = vmatprep.subr.mxu0 0.0
    %852 = vmatpush1.msra.mxu0 0.0
    %853 = vmatprep.subr.mxu0 0.0
    %854 = vmatpush1.msra.mxu0 0.0
    %855 = vmatprep.subr.mxu0 0.0
    %856 = vmatpush1.msra.mxu0 0.0
    %857 = vmatprep.subr.mxu0 0.0
    %858 = vmatpush1.msra.mxu0 0.0
    %859 = vmatprep.subr.mxu0 0.0
    %860 = vmatpush1.msra.mxu0 0.0
    %861 = vmatprep.subr.mxu0 0.0
    %862 = vmatpush1.msra.mxu0 0.0
    %863 = vmatprep.subr.mxu0 0.0
    %864 = vmatpush1.msra.mxu0 0.0
    %865 = vmatprep.subr.mxu0 0.0
    %866 = vmatpush1.msra.mxu0 0.0
    %867 = vmatprep.subr.mxu0 0.0
    %868 = vmatpush1.msra.mxu0 0.0
    %869 = vmatprep.subr.mxu0 0.0
    %870 = vmatpush1.msra.mxu0 0.0
    %871 = vmatprep.subr.mxu0 0.0
    %872 = vmatpush1.msra.mxu0 0.0
    %873 = vmatprep.subr.mxu0 0.0
    %874 = vmatpush1.msra.mxu0 0.0
    %875 = vmatprep.subr.mxu0 0.0
    %876 = vmatpush1.msra.mxu0 0.0
    %877 = vmatprep.subr.mxu0 0.0
    %878 = vmatpush1.msra.mxu0 0.0
    %879 = vmatprep.subr.mxu0 0.0
    %880 = vmatpush1.msra.mxu0 0.0
    %881 = vmatprep.subr.mxu0 0.0
    %882 = vmatpush1.msra.mxu0 0.0
    %883 = vmatprep.subr.mxu0 0.0
    %884 = vmatpush1.msra.mxu0 0.0
    %885 = vmatprep.subr.mxu0 0.0
    %886 = vmatpush1.msra.mxu0 0.0
    %887 = vmatprep.subr.mxu0 0.0
    %888 = vmatpush1.msra.mxu0 0.0
    %889 = vmatprep.subr.mxu0 0.0
    %890 = vmatpush1.msra.mxu0 0.0
    %891 = vmatprep.mubr.f32.mxu0 0.0
    %892 = vmatmul.mubr.f32.gmra.mrb[0].mxu0 %v825
    %v893 = vpop.f32.mrb[0].mxu0
    %v894 = vadd.f32 %v822, %v893
    %v895 = vpop.f32.mrb[0].mxu0
    %896 = vdwg.mxu0
    %897 = vst [vmem:[#allocation5] sm:$0x3] %v894
    // Predicated region
    $region38: #{lstm_classifier.1} parent=1 // pred_check
      _
    $region39: #{lstm_classifier.1} parent=1 // pred_check_branch
      %899 = sbr.rel (0) target = $region41
    $region40: #{lstm_classifier.1} parent=1 // pred_region
      %s901 = ssub.s32 32, 32
      %902 = vsyncadd [#allocation4], %s901
      %s904 = sshll.u32 [#allocation5], 4
      %s905 = int_to_ptr.vmem [resolvable:$true] %s904
      %907 = dma.vmem_to_hbm [thread:$0]  %s905, 32, %s8, [#allocation4]
    $region41: #{lstm_classifier.1} parent=1 // pred_fallthru
      _
    // Predicated region
    $region42: #{lstm_classifier.1} parent=1 // pred_check
      _
    $region43: #{lstm_classifier.1} parent=1 // pred_check_branch
      %909 = sbr.rel (0) target = $region45
    $region44: #{lstm_classifier.1} parent=1 // pred_region
      %910 = dma.done [#allocation4], 32
    $region45: #{lstm_classifier.1} parent=1 // pred_fallthru
      _
    %911 = vsyncpa [#allocation3], 1
    %912 = vsyncpa [#allocation4], 1

</llo_original>
